<compile_context>
chip_gen: v6e
topology: v6e:2x2x1
jax: 0.10.0
libtpu: 0.0.40
codegen_flags: <defaults>
</compile_context>

<pallas_src>
import jax
import jax.numpy as jnp
from jax.experimental import pallas as pl
from jax.experimental.pallas import tpu as pltpu


# Sublane packing per element size (float dtypes only; non-float inputs take
# the XLA fallback path, so the itemsize-1 entry only applies to fp8 floats).
_SUBLANE = {4: 8, 2: 16, 1: 32}
_LANE_WIDTHS = (512, 256, 128)   # lane-dense widths (multiples of 128), widest first


def _h_sigmoid_kernel(x_ref, o_ref):
    x = x_ref[...]
    # relu6(x + 3) / 6 == clamp(x + 3, 0, 6) * (1/6); weak-typed literals keep
    # float inputs in their own dtype.
    o_ref[...] = (jnp.clip(x + 3.0, 0.0, 6.0) * (1.0 / 6.0)).astype(o_ref.dtype)


def _xla_h_sigmoid(x):
    return jnp.clip(x + 3.0, 0.0, 6.0) * (1.0 / 6.0)


def _device_block_defaults():
    """(block_bytes, vmem_limit_bytes) tuned per TPU generation."""
    kind = ""
    try:
        kind = jax.devices()[0].device_kind.lower()
    except Exception:
        pass
    if "v2" in kind or "v3" in kind:
        return 1 << 20, None               # small VMEM: stay conservative
    if "v5 lite" in kind or "v5e" in kind or "v5litepod" in kind:
        return 2 << 20, None               # 4 x 2 MiB fits v5e's 16 MiB default scope
    if "v6" in kind:
        return 4 << 20, 48 << 20           # ~3 us/step at 1.4 TB/s, overhead amortized
    if "v7" in kind or "7x" in kind:
        return 8 << 20, 48 << 20           # 3.2 TB/s HBM; 4 x 8 MiB << 64 MiB physical
    return 4 << 20, 48 << 20               # unknown / v4 / v5p: safe middle ground


def h_sigmoid(x, *, xla_fallback_below_bytes: int = 1 << 20,
              block_bytes=None, donate_input: bool = False):
    """Elementwise hard-sigmoid matching torch: ReLU6(x + 3) / 6.

    donate_input=True adds input_output_aliases={0: 0}; only use it when the
    caller no longer needs x (in-place semantics).
    """
    dtype = x.dtype
    total = int(x.size)
    itemsize = jnp.dtype(dtype).itemsize
    is_float = jnp.issubdtype(dtype, jnp.floating)

    # Lane-dense width that divides the element count exactly -> the reshape
    # below is a free bitcast (no pad, no slice).
    cols = next((c for c in _LANE_WIDTHS if total % c == 0), None) if total else None

    # XLA fallback: tiny inputs (launch/step overhead dominates), lane-ragged
    # sizes (pad+slice would ~3x HBM traffic vs. one fused pass), non-float
    # dtypes (hard-sigmoid on integer codes is not meaningful here).
    if (cols is None or not is_float
            or total * itemsize < xla_fallback_below_bytes):
        return _xla_h_sigmoid(x)

    dev_block, vmem_limit = _device_block_defaults()
    if block_bytes is None:
        block_bytes = dev_block

    rows = total // cols
    x2d = x.reshape(rows, cols)            # contiguous reshape: no copy

    sublane = _SUBLANE.get(itemsize, 8)
    tile_r = max(sublane, (block_bytes // (cols * itemsize)) // sublane * sublane)
    if rows <= tile_r:
        tile_r = rows                      # single block == full array (always legal)
        grid = (1,)
    else:
        grid = (pl.cdiv(rows, tile_r),)    # partial last block handled by masked stores

    out2d = pl.pallas_call(
        _h_sigmoid_kernel,
        out_shape=jax.ShapeDtypeStruct((rows, cols), dtype),
        grid_spec=pltpu.PrefetchScalarGridSpec(
            num_scalar_prefetch=0,
            grid=grid,
            in_specs=[pl.BlockSpec((tile_r, cols), lambda i: (i, 0))],
            out_specs=pl.BlockSpec((tile_r, cols), lambda i: (i, 0)),
        ),
        compiler_params=pltpu.CompilerParams(
            # On v7x, verify in xprof that both TensorCores get grid shards;
            # if not, switch this axis to pltpu.CORE_PARALLEL.
            dimension_semantics=("parallel",),
            vmem_limit_bytes=vmem_limit,
        ),
        cost_estimate=pl.CostEstimate(
            flops=3 * total,
            transcendentals=0,
            bytes_accessed=2 * total * itemsize,
        ),
        input_output_aliases=({0: 0} if donate_input else {}),
    )(x2d)

    return out2d.reshape(x.shape)


def _ref(x):
    y = jnp.clip(x.astype(jnp.float32) + 3.0, 0.0, 6.0) / 6.0
    return y.astype(x.dtype)


if __name__ == "__main__":
    key = jax.random.PRNGKey(0)
    k0, k1, k2, k3, k4 = jax.random.split(key, 5)

    # 1) Module-sized NCHW input (batch=2, channels=4, spatial=16, f32);
    #    force the Pallas path (single full-array block, cols=512).
    x_small = jax.random.normal(k0, (2, 4, 16, 16), dtype=jnp.float32) * 4.0
    y_small = jax.block_until_ready(h_sigmoid(x_small, xla_fallback_below_bytes=0))
    assert y_small.shape == x_small.shape and y_small.dtype == x_small.dtype
    assert jnp.allclose(y_small, _ref(x_small), atol=1e-6, rtol=1e-6)

    # 2) Ragged row count (rows=30, tile_r=16) -> masked partial last block,
    #    no padding or slicing anywhere.
    x_rr = jax.random.normal(k1, (2, 3, 40, 64), dtype=jnp.float32) * 4.0
    y_rr = jax.block_until_ready(
        h_sigmoid(x_rr, xla_fallback_below_bytes=0, block_bytes=32 << 10))
    assert jnp.allclose(y_rr, _ref(x_rr), atol=1e-6, rtol=1e-6)

    # 3) bf16 whose size is a multiple of 256 but not 512 -> cols=256 path.
    x_bf16 = (jax.random.normal(k2, (2, 3, 8, 16), dtype=jnp.float32) * 4.0
              ).astype(jnp.bfloat16)
    y_bf16 = jax.block_until_ready(h_sigmoid(x_bf16, xla_fallback_below_bytes=0))
    assert y_bf16.shape == x_bf16.shape and y_bf16.dtype == jnp.bfloat16
    assert jnp.allclose(y_bf16.astype(jnp.float32),
                        _ref(x_bf16).astype(jnp.float32), atol=2e-2)

    # 4) Lane-ragged size (210 elements, not a multiple of 128) -> XLA fallback.
    x_odd = (jax.random.normal(k3, (2, 3, 7, 5), dtype=jnp.float32) * 4.0
             ).astype(jnp.bfloat16)
    y_odd = jax.block_until_ready(h_sigmoid(x_odd))
    assert y_odd.shape == x_odd.shape and y_odd.dtype == x_odd.dtype
    assert jnp.allclose(y_odd.astype(jnp.float32),
                        _ref(x_odd).astype(jnp.float32), atol=2e-2)

    # 5) Larger f32 input with default per-generation block size / VMEM limit
    #    -> multi-block pipelined path (grid > 1 on v5e/v6e).
    x_big = jax.random.normal(k4, (8, 64, 64, 64), dtype=jnp.float32) * 4.0
    y_big = jax.block_until_ready(h_sigmoid(x_big))
    assert jnp.allclose(y_big, _ref(x_big), atol=1e-6, rtol=1e-6)

    print("KERNEL_OK")
</pallas_src>

<mosaic_0001>
module attributes {stable_mosaic.version = 11 : i64} {
  func.func @_h_sigmoid_kernel(%arg0: i32, %arg1: memref<4x512xf32, #tpu.memory_space<vmem>>, %arg2: memref<4x512xf32, #tpu.memory_space<vmem>>) attributes {dimension_semantics = [#tpu.dimension_semantics<parallel>], iteration_bounds = array<i64: 1>, scalar_prefetch = 0 : i64, scratch_operands = 0 : i64, tpu.core_type = #tpu.core_type<tc>, window_params = [{transform_indices = @transform_0, window_bounds = array<i64: 4, 512>}, {transform_indices = @transform_1, window_bounds = array<i64: 4, 512>}]} {
    %c0 = arith.constant 0 : index
    %c0_0 = arith.constant 0 : index
    %0 = vector.load %arg1[%c0, %c0_0] : memref<4x512xf32, #tpu.memory_space<vmem>>, vector<4x512xf32>
    %cst = arith.constant 3.000000e+00 : f32
    %1 = vector.broadcast %cst : f32 to vector<4x512xf32>
    %2 = arith.addf %0, %1 : vector<4x512xf32>
    %cst_1 = arith.constant 0.000000e+00 : f32
    %cst_2 = arith.constant 6.000000e+00 : f32
    %3 = vector.broadcast %cst_1 : f32 to vector<4x512xf32>
    %4 = arith.maximumf %3, %2 : vector<4x512xf32>
    %5 = vector.broadcast %cst_2 : f32 to vector<4x512xf32>
    %6 = arith.minimumf %5, %4 : vector<4x512xf32>
    %cst_3 = arith.constant 0.166666672 : f32
    %7 = vector.broadcast %cst_3 : f32 to vector<4x512xf32>
    %8 = arith.mulf %6, %7 : vector<4x512xf32>
    %c0_4 = arith.constant 0 : index
    %c0_5 = arith.constant 0 : index
    %9 = vector.load %arg2[%c0_4, %c0_5] : memref<4x512xf32, #tpu.memory_space<vmem>>, vector<4x512xf32>
    tpu.vector_store %arg2[%c0_4, %c0_5], %8 {strides = array<i32>} : memref<4x512xf32, #tpu.memory_space<vmem>>, vector<4x512xf32>,
    return
  }
  func.func @transform_0(%arg0: i32) -> (i32, i32) {
    %c0_i32 = arith.constant 0 : i32
    %c0_i32_0 = arith.constant 0 : i32
    return %arg0, %c0_i32 : i32, i32
  }
  func.func @transform_1(%arg0: i32) -> (i32, i32) {
    %c0_i32 = arith.constant 0 : i32
    %c0_i32_0 = arith.constant 0 : i32
    return %arg0, %c0_i32 : i32, i32
  }
}

</mosaic_0001>

<llo_original>
// kernel: tpu_custom_call.1
$region0: #{tpu_custom_call.1}
  #allocation0 [shape = 'u32[]', space=smem, size = 0x4, offset = 0x4, fixed_abs, tag = 'smem constant byte address 0x4 - core index']
  #allocation1 [shape = 'u32[144,128]{1,0:T(1,128)}', space=vmem, size = 0x12000, scoped, tag = 'internal scratch']
  %s0 = inlined_call_operand.hbm [shape: f32[4,512], index: 0, kind: input, shape index: {}]
  %s1 = inlined_call_operand.hbm [shape: f32[4,512], index: 1, kind: output, shape index: {}]
  %s2 = sld [smem:[#allocation0]]
  $region18: #{tpu_custom_call.1} parent=0
    _
  %s4 = ssub.s32 1, %s2
  %s5 = scalar_select 0, %s4, %s2
  $region1: #{tpu_custom_call.1} parent=0
    #allocation2 [shape = 'u8[8192]{0}', space=vmem, size = 0x2000, scoped, tag = 'input window, operand 0, single buffered']
    #allocation3 [shape = 's32[1]{0}', space=sflag, size = 0x4, scoped, tag = 'scoped memory for tpu_custom_call.1']
    #allocation4 [shape = 's32[1]{0}', space=sflag, size = 0x4, scoped, tag = 'scoped memory for tpu_custom_call.1']
    #allocation5 [shape = 'u8[8192]{0}', space=vmem, size = 0x2000, scoped, tag = 'output window, operand 0, single buffered']
    %6 = vsyncpa [#allocation3], 0
    %7 = vsyncpa [#allocation4], 0
    // Predicated region
    $region2: #{tpu_custom_call.1} parent=1 // pred_check
      _
    $region3: #{tpu_custom_call.1} parent=1 // pred_check_branch
      %9 = sbr.rel (0) target = $region5
    $region4: #{tpu_custom_call.1} parent=1 // pred_region
      %s11 = ssub.s32 256, 256
      %12 = vsyncadd [#allocation3], %s11
      %s14 = sshll.u32 [#allocation2], 4
      %s15 = int_to_ptr.vmem [resolvable:$true] %s14
      %17 = dma.hbm_to_vmem [thread:$0]  %s0, 256, %s15, [#allocation3]
    $region5: #{tpu_custom_call.1} parent=1 // pred_fallthru
      _
    // Predicated region
    $region6: #{tpu_custom_call.1} parent=1 // pred_check
      _
    $region7: #{tpu_custom_call.1} parent=1 // pred_check_branch
      %19 = sbr.rel (0) target = $region9
    $region8: #{tpu_custom_call.1} parent=1 // pred_region
      %20 = dma.done [#allocation3], 256
    $region9: #{tpu_custom_call.1} parent=1 // pred_fallthru
      _
    %v21 = vld [vmem:[#allocation2] sm:$0xff]
    %v22 = vld [vmem:[#allocation2 + $0x8] sm:$0xff]
    %v23 = vadd.f32 %v21, 3.0
    %v24 = vadd.f32 %v22, 3.0
    %v25 = vmax.f32 %v23, 0.0
    %v26 = vmax.f32 %v24, 0.0
    %v27 = vmin.f32 %v25, 6.0
    %v28 = vmin.f32 %v26, 6.0
    %v29 = vmul.f32 %v27, 0.16666667
    %v30 = vmul.f32 %v28, 0.16666667
    %31 = vst [vmem:[#allocation5] sm:$0xff] %v29
    %32 = vst [vmem:[#allocation5 + $0x8] sm:$0xff] %v30
    // Predicated region
    $region10: #{tpu_custom_call.1} parent=1 // pred_check
      _
    $region11: #{tpu_custom_call.1} parent=1 // pred_check_branch
      %34 = sbr.rel (0) target = $region13
    $region12: #{tpu_custom_call.1} parent=1 // pred_region
      %s36 = ssub.s32 256, 256
      %37 = vsyncadd [#allocation4], %s36
      %s39 = sshll.u32 [#allocation5], 4
      %s40 = int_to_ptr.vmem [resolvable:$true] %s39
      %42 = dma.vmem_to_hbm [thread:$0]  %s40, 256, %s1, [#allocation4]
    $region13: #{tpu_custom_call.1} parent=1 // pred_fallthru
      _
    // Predicated region
    $region14: #{tpu_custom_call.1} parent=1 // pred_check
      _
    $region15: #{tpu_custom_call.1} parent=1 // pred_check_branch
      %44 = sbr.rel (0) target = $region17
    $region16: #{tpu_custom_call.1} parent=1 // pred_region
      %45 = dma.done [#allocation4], 256
    $region17: #{tpu_custom_call.1} parent=1 // pred_fallthru
      _
    %46 = vsyncpa [#allocation3], 1
    %47 = vsyncpa [#allocation4], 1

</llo_original>
